<compile_context>
chip_gen: v6e
topology: v6e:2x2x1
jax: 0.10.0
libtpu: 0.0.40
codegen_flags: <defaults>
</compile_context>

<pallas_src>
import jax
import jax.numpy as jnp
from jax.experimental import pallas as pl
from jax.experimental.pallas import tpu as pltpu

LANE = 128
SUB = 8


def _round_up(x, m):
    return ((x + m - 1) // m) * m


# --------------------------------------------------------------------------
# VMEM budgeting / tile selection
# --------------------------------------------------------------------------
def _vmem_budget_bytes():
    """~75% of this chip's physical VMEM (48 MiB conservative fallback)."""
    cap = None
    try:
        info = pltpu.get_tpu_info()
        cap = getattr(info, "vmem_capacity_bytes", None)
    except Exception:
        cap = None
    if cap is None or cap <= 0:
        cap = 64 * 1024 * 1024          # safe on every generation (v7x-sized)
    return int(min(cap * 3 // 4, 100 * 1024 * 1024))


def _estimate_vmem_bytes(tm, tk, enc_pad, lat_pad, out_w, with_eps, k_tiled):
    """Bytes Pallas actually allocates (default 2 buffers per streamed/resident
    operand, single f32 accumulator scratch when K is tiled)."""
    b = 0
    b += 2 * tm * tk * 4                      # x tile        (f32, 2 bufs)
    b += 2 * tk * enc_pad * 2                 # We tile       (bf16, 2 bufs)
    b += 2 * enc_pad * 4                      # be            (f32, 2 bufs)
    b += 2 * enc_pad * (2 * lat_pad) * 2      # fused head W  (bf16, 2 bufs)
    b += 2 * (2 * lat_pad) * 4                # fused head b  (f32, 2 bufs)
    if with_eps:
        b += 2 * tm * lat_pad * 4             # eps tile      (f32, 2 bufs)
    b += 2 * tm * out_w * 4                   # fused output  (f32, 2 bufs)
    if k_tiled:
        b += tm * enc_pad * 4                 # f32 accumulator scratch
    return b


def _choose_tiles(n, k_pad, enc_pad, lat_pad, out_w, with_eps, budget):
    headroom = 2 * 1024 * 1024
    if n <= 256:
        tm_cands = [n]                        # single batch tile, no batch pad
    else:
        tm_cands = [t for t in (512, 256, 128) if n > t] or [128]
    tk_cands = [k_pad] + [t for t in (2048, 1024, 512, 256, 128)
                          if t < k_pad and k_pad % t == 0]
    for tm in tm_cands:
        for tk in tk_cands:
            k_tiled = (tk != k_pad)
            est = _estimate_vmem_bytes(tm, tk, enc_pad, lat_pad, out_w,
                                       with_eps, k_tiled)
            if est + headroom <= budget:
                return tm, tk, k_tiled, est
    tm, tk = tm_cands[-1], tk_cands[-1]
    k_tiled = (tk != k_pad)
    return tm, tk, k_tiled, _estimate_vmem_bytes(tm, tk, enc_pad, lat_pad,
                                                 out_w, with_eps, k_tiled)


# --------------------------------------------------------------------------
# Kernels
# --------------------------------------------------------------------------
def _heads(h_f32, wh_ref, bh_ref, lat_pad):
    """Fused mu/sigma heads: bf16 MXU matmul (f32 acc), f32 bias/exp."""
    heads = jnp.dot(h_f32.astype(jnp.bfloat16), wh_ref[...],
                    preferred_element_type=jnp.float32) + bh_ref[...]
    mu = heads[:, :lat_pad]
    sigma = jnp.exp(heads[:, lat_pad:])
    return mu, sigma


# ---- K collapsed to one step: no accumulator, no pl.when ------------------
def _enc_single_random(x_ref, we_ref, be_ref, wh_ref, bh_ref, eps_ref, out_ref):
    lat_pad = eps_ref.shape[-1]
    h = jnp.dot(x_ref[...].astype(jnp.bfloat16), we_ref[...],
                preferred_element_type=jnp.float32) + be_ref[...]
    mu, sigma = _heads(h, wh_ref, bh_ref, lat_pad)
    z = mu + sigma * eps_ref[...]
    out_ref[:, :lat_pad] = z
    out_ref[:, lat_pad:2 * lat_pad] = mu
    out_ref[:, 2 * lat_pad:] = sigma


def _enc_single_norandom(x_ref, we_ref, be_ref, wh_ref, bh_ref, out_ref):
    lat_pad = out_ref.shape[-1] // 2
    h = jnp.dot(x_ref[...].astype(jnp.bfloat16), we_ref[...],
                preferred_element_type=jnp.float32) + be_ref[...]
    mu, sigma = _heads(h, wh_ref, bh_ref, lat_pad)
    out_ref[:, :lat_pad] = mu
    out_ref[:, lat_pad:] = sigma


# ---- K-tiled path: f32 VMEM accumulator, bias folded into init ------------
def _enc_tiled_random(x_ref, we_ref, be_ref, wh_ref, bh_ref, eps_ref,
                      out_ref, acc_ref):
    k = pl.program_id(1)

    @pl.when(k == 0)
    def _():
        acc_ref[...] = jnp.broadcast_to(be_ref[...], acc_ref.shape)

    acc_ref[...] += jnp.dot(x_ref[...].astype(jnp.bfloat16), we_ref[...],
                            preferred_element_type=jnp.float32)

    @pl.when(k == pl.num_programs(1) - 1)
    def _():
        lat_pad = eps_ref.shape[-1]
        mu, sigma = _heads(acc_ref[...], wh_ref, bh_ref, lat_pad)
        z = mu + sigma * eps_ref[...]
        out_ref[:, :lat_pad] = z
        out_ref[:, lat_pad:2 * lat_pad] = mu
        out_ref[:, 2 * lat_pad:] = sigma


def _enc_tiled_norandom(x_ref, we_ref, be_ref, wh_ref, bh_ref, out_ref, acc_ref):
    k = pl.program_id(1)

    @pl.when(k == 0)
    def _():
        acc_ref[...] = jnp.broadcast_to(be_ref[...], acc_ref.shape)

    acc_ref[...] += jnp.dot(x_ref[...].astype(jnp.bfloat16), we_ref[...],
                            preferred_element_type=jnp.float32)

    @pl.when(k == pl.num_programs(1) - 1)
    def _():
        lat_pad = out_ref.shape[-1] // 2
        mu, sigma = _heads(acc_ref[...], wh_ref, bh_ref, lat_pad)
        out_ref[:, :lat_pad] = mu
        out_ref[:, lat_pad:] = sigma


# --------------------------------------------------------------------------
# Parameter prep (done ONCE) + forward wrapper
# --------------------------------------------------------------------------
def prepare_params(params, in_dims):
    """Pad + cast all weight operands once (they are constants per model)."""
    we_t, be, wmu_t, bmu, wsig_t, bsig = params
    enc_dims = we_t.shape[1]
    lat_dims = wmu_t.shape[1]
    assert we_t.shape[0] == in_dims

    k_pad = _round_up(in_dims, LANE)
    enc_pad = _round_up(enc_dims, LANE)
    lat_pad = _round_up(lat_dims, LANE)
    f32, bf16 = jnp.float32, jnp.bfloat16

    we_p = jnp.zeros((k_pad, enc_pad), bf16).at[:in_dims, :enc_dims].set(
        we_t.astype(bf16))
    be_p = jnp.zeros((1, enc_pad), f32).at[0, :enc_dims].set(be.astype(f32))
    # Fused head weight: (enc_pad, 2*lat_pad) = [Wmu_T | Wsig_T], bf16.
    wh_p = jnp.zeros((enc_pad, 2 * lat_pad), bf16)
    wh_p = wh_p.at[:enc_dims, :lat_dims].set(wmu_t.astype(bf16))
    wh_p = wh_p.at[:enc_dims, lat_pad:lat_pad + lat_dims].set(wsig_t.astype(bf16))
    bh_p = jnp.zeros((1, 2 * lat_pad), f32)
    bh_p = bh_p.at[0, :lat_dims].set(bmu.astype(f32))
    bh_p = bh_p.at[0, lat_pad:lat_pad + lat_dims].set(bsig.astype(f32))

    dims = dict(in_dims=in_dims, enc_dims=enc_dims, lat_dims=lat_dims,
                k_pad=k_pad, enc_pad=enc_pad, lat_pad=lat_pad)
    return (we_p, be_p, wh_p, bh_p), dims


def variational_encoder_forward(x, prepared, eps=None, random=True):
    """x: (N, C, H, W) or (N, in_dims) float32.  Returns (z, mu, sigma)."""
    (we_p, be_p, wh_p, bh_p), dims = prepared
    in_dims = dims["in_dims"]
    lat_dims = dims["lat_dims"]
    k_pad, enc_pad, lat_pad = dims["k_pad"], dims["enc_pad"], dims["lat_pad"]
    f32 = jnp.float32

    N = x.shape[0]
    x2d = x.reshape(N, -1).astype(f32)
    assert x2d.shape[1] == in_dims

    out_w = (3 if random else 2) * lat_pad
    budget = _vmem_budget_bytes()
    tm, tk, k_tiled, est = _choose_tiles(N, k_pad, enc_pad, lat_pad, out_w,
                                         random, budget)
    n_rows = _round_up(N, tm)
    grid_i = n_rows // tm

    # Pad x only when geometry requires it (otherwise stream it as-is, f32).
    if n_rows != N or k_pad != in_dims:
        x_in = jnp.zeros((n_rows, k_pad), f32).at[:N, :in_dims].set(x2d)
    else:
        x_in = x2d

    vmem_limit = int(min(budget, max(16 * 1024 * 1024, est + 4 * 1024 * 1024)))

    if k_tiled:
        grid = (grid_i, k_pad // tk)
        dim_sem = ("parallel", "arbitrary")
        x_spec = pl.BlockSpec((tm, tk), lambda i, k: (i, k))
        we_spec = pl.BlockSpec((tk, enc_pad), lambda i, k: (k, 0))
        be_spec = pl.BlockSpec((1, enc_pad), lambda i, k: (0, 0))
        wh_spec = pl.BlockSpec((enc_pad, 2 * lat_pad), lambda i, k: (0, 0))
        bh_spec = pl.BlockSpec((1, 2 * lat_pad), lambda i, k: (0, 0))
        eps_spec = pl.BlockSpec((tm, lat_pad), lambda i, k: (i, 0))
        out_spec = pl.BlockSpec((tm, out_w), lambda i, k: (i, 0))
        scratch = [pltpu.VMEM((tm, enc_pad), f32)]
        kernel = _enc_tiled_random if random else _enc_tiled_norandom
    else:
        grid = (grid_i,)
        dim_sem = ("parallel",)
        x_spec = pl.BlockSpec((tm, k_pad), lambda i: (i, 0))
        we_spec = pl.BlockSpec((k_pad, enc_pad), lambda i: (0, 0))
        be_spec = pl.BlockSpec((1, enc_pad), lambda i: (0, 0))
        wh_spec = pl.BlockSpec((enc_pad, 2 * lat_pad), lambda i: (0, 0))
        bh_spec = pl.BlockSpec((1, 2 * lat_pad), lambda i: (0, 0))
        eps_spec = pl.BlockSpec((tm, lat_pad), lambda i: (i, 0))
        out_spec = pl.BlockSpec((tm, out_w), lambda i: (i, 0))
        scratch = []
        kernel = _enc_single_random if random else _enc_single_norandom

    in_specs = [x_spec, we_spec, be_spec, wh_spec, bh_spec]
    args = [x_in, we_p, be_p, wh_p, bh_p]
    if random:
        assert eps is not None and eps.shape == (N, lat_dims)
        eps_p = jnp.zeros((n_rows, lat_pad), f32).at[:N, :lat_dims].set(
            eps.astype(f32))
        in_specs.append(eps_spec)
        args.append(eps_p)

    out = pl.pallas_call(
        kernel,
        out_shape=jax.ShapeDtypeStruct((n_rows, out_w), f32),
        grid_spec=pltpu.PrefetchScalarGridSpec(
            num_scalar_prefetch=0,
            grid=grid,
            in_specs=in_specs,
            out_specs=out_spec,
            scratch_shapes=scratch,
        ),
        compiler_params=pltpu.CompilerParams(
            dimension_semantics=dim_sem,
            vmem_limit_bytes=vmem_limit,
        ),
    )(*args)

    if random:
        z = out[:N, :lat_dims]
        mu = out[:N, lat_pad:lat_pad + lat_dims]
        sigma = out[:N, 2 * lat_pad:2 * lat_pad + lat_dims]
    else:
        mu = out[:N, :lat_dims]
        sigma = out[:N, lat_pad:lat_pad + lat_dims]
        z = mu
    return z, mu, sigma


def init_params(key, in_dims, encoder_dims, latent_dims):
    """Deterministic init mimicking nn.Linear default (uniform +-1/sqrt(fan_in)).
    Weights are stored pre-transposed as (in, out)."""
    ks = jax.random.split(key, 6)

    def lin(kw, kb, fan_in, fan_out):
        bound = 1.0 / jnp.sqrt(fan_in)
        w_t = jax.random.uniform(kw, (fan_in, fan_out), jnp.float32, -bound, bound)
        b = jax.random.uniform(kb, (fan_out,), jnp.float32, -bound, bound)
        return w_t, b

    we_t, be = lin(ks[0], ks[1], in_dims, encoder_dims)          # wrapped encoder
    wmu_t, bmu = lin(ks[2], ks[3], encoder_dims, latent_dims)    # linear_mu
    wsig_t, bsig = lin(ks[4], ks[5], encoder_dims, latent_dims)  # linear_sigma
    return (we_t, be, wmu_t, bmu, wsig_t, bsig)


if __name__ == "__main__":
    # batch=2, channels=4, spatial=16x16 -> flattened in_dims=1024
    N, C, H, W = 2, 4, 16, 16
    in_dims = C * H * W          # 1024
    encoder_dims = 32
    latent_dims = 8

    key = jax.random.PRNGKey(0)
    kx, kp, ke = jax.random.split(key, 3)

    x = jax.random.normal(kx, (N, C, H, W), jnp.float32)
    params = init_params(kp, in_dims, encoder_dims, latent_dims)
    prepared = prepare_params(params, in_dims)     # one-time weight pad/cast
    # eps ~ Normal(0, 1), same shape as mu (torch: self.distribution.sample(mu.shape))
    eps = jax.random.normal(ke, (N, latent_dims), jnp.float32)

    z, mu, sigma = variational_encoder_forward(x, prepared, eps, random=True)
    jax.block_until_ready((z, mu, sigma))

    # ---- plain-JAX reference (mirrors the kernel's bf16 operand rounding) --
    we_t, be, wmu_t, bmu, wsig_t, bsig = params
    f32, bf16 = jnp.float32, jnp.bfloat16
    hi = jax.lax.Precision.HIGHEST
    x2d = x.reshape(N, -1)
    xb = x2d.astype(bf16).astype(f32)
    web = we_t.astype(bf16).astype(f32)
    h_ref = jnp.dot(xb, web, precision=hi) + be
    hb = h_ref.astype(bf16).astype(f32)
    mu_ref = jnp.dot(hb, wmu_t.astype(bf16).astype(f32), precision=hi) + bmu
    sigma_ref = jnp.exp(jnp.dot(hb, wsig_t.astype(bf16).astype(f32), precision=hi) + bsig)
    z_ref = mu_ref + sigma_ref * eps

    assert jnp.allclose(mu, mu_ref, atol=2e-2, rtol=2e-2)
    assert jnp.allclose(sigma, sigma_ref, atol=2e-2, rtol=2e-2)
    assert jnp.allclose(z, z_ref, atol=2e-2, rtol=2e-2)

    # ---- deterministic path: z == mu, no eps / reparam work ----------------
    z_d, mu_d, sigma_d = variational_encoder_forward(x, prepared, random=False)
    jax.block_until_ready((z_d, mu_d, sigma_d))
    assert jnp.allclose(z_d, mu_d)
    assert jnp.allclose(mu_d, mu_ref, atol=2e-2, rtol=2e-2)
    assert jnp.allclose(sigma_d, sigma_ref, atol=2e-2, rtol=2e-2)

    print("KERNEL_OK")
</pallas_src>

<mosaic_0001>
module attributes {stable_mosaic.version = 11 : i64} {
  func.func @_enc_single_random(%arg0: i32, %arg1: memref<2x1024xf32, #tpu.memory_space<vmem>>, %arg2: memref<1024x128xbf16, #tpu.memory_space<vmem>>, %arg3: memref<1x128xf32, #tpu.memory_space<vmem>>, %arg4: memref<128x256xbf16, #tpu.memory_space<vmem>>, %arg5: memref<1x256xf32, #tpu.memory_space<vmem>>, %arg6: memref<2x128xf32, #tpu.memory_space<vmem>>, %arg7: memref<2x384xf32, #tpu.memory_space<vmem>>) attributes {dimension_semantics = [#tpu.dimension_semantics<parallel>], iteration_bounds = array<i64: 1>, scalar_prefetch = 0 : i64, scratch_operands = 0 : i64, tpu.core_type = #tpu.core_type<tc>, window_params = [{transform_indices = @transform_0, window_bounds = array<i64: 2, 1024>}, {pipeline_mode = #tpu.pipeline_mode<synchronous>, transform_indices = @transform_1, window_bounds = array<i64: 1024, 128>}, {pipeline_mode = #tpu.pipeline_mode<synchronous>, transform_indices = @transform_2, window_bounds = array<i64: 1, 128>}, {pipeline_mode = #tpu.pipeline_mode<synchronous>, transform_indices = @transform_3, window_bounds = array<i64: 128, 256>}, {pipeline_mode = #tpu.pipeline_mode<synchronous>, transform_indices = @transform_4, window_bounds = array<i64: 1, 256>}, {transform_indices = @transform_5, window_bounds = array<i64: 2, 128>}, {transform_indices = @transform_6, window_bounds = array<i64: 2, 384>}]} {
    %c0 = arith.constant 0 : index
    %c0_0 = arith.constant 0 : index
    %0 = vector.load %arg1[%c0, %c0_0] : memref<2x1024xf32, #tpu.memory_space<vmem>>, vector<2x1024xf32>
    %1 = arith.truncf %0 : vector<2x1024xf32> to vector<2x1024xbf16>
    %c0_1 = arith.constant 0 : index
    %c0_2 = arith.constant 0 : index
    %2 = vector.load %arg2[%c0_1, %c0_2] : memref<1024x128xbf16, #tpu.memory_space<vmem>>, vector<1024x128xbf16>
    %cst = arith.constant dense<0.000000e+00> : vector<2x128xf32>
    %3 = tpu.matmul %1, %2, %cst {dimension_numbers = #tpu.dot_dimension_numbers<[1], [0], [0], [1], [0, 0, 1, 1], [], []>} : vector<2x1024xbf16>, vector<1024x128xbf16>, vector<2x128xf32> -> vector<2x128xf32>
    %c0_3 = arith.constant 0 : index
    %c0_4 = arith.constant 0 : index
    %4 = vector.load %arg3[%c0_3, %c0_4] : memref<1x128xf32, #tpu.memory_space<vmem>>, vector<1x128xf32>
    %5 = vector.broadcast %4 : vector<1x128xf32> to vector<2x128xf32>
    %6 = arith.addf %3, %5 : vector<2x128xf32>
    %7 = arith.truncf %6 : vector<2x128xf32> to vector<2x128xbf16>
    %c0_5 = arith.constant 0 : index
    %c0_6 = arith.constant 0 : index
    %8 = vector.load %arg4[%c0_5, %c0_6] : memref<128x256xbf16, #tpu.memory_space<vmem>>, vector<128x256xbf16>
    %cst_7 = arith.constant dense<0.000000e+00> : vector<2x256xf32>
    %9 = tpu.matmul %7, %8, %cst_7 {dimension_numbers = #tpu.dot_dimension_numbers<[1], [0], [0], [1], [0, 0, 1, 1], [], []>} : vector<2x128xbf16>, vector<128x256xbf16>, vector<2x256xf32> -> vector<2x256xf32>
    %c0_8 = arith.constant 0 : index
    %c0_9 = arith.constant 0 : index
    %10 = vector.load %arg5[%c0_8, %c0_9] : memref<1x256xf32, #tpu.memory_space<vmem>>, vector<1x256xf32>
    %11 = vector.broadcast %10 : vector<1x256xf32> to vector<2x256xf32>
    %12 = arith.addf %9, %11 : vector<2x256xf32>
    %13 = vector.extract_strided_slice %12 {offsets = [0, 0], sizes = [2, 128], strides = [1, 1]} : vector<2x256xf32> to vector<2x128xf32>
    %14 = vector.extract_strided_slice %12 {offsets = [0, 128], sizes = [2, 128], strides = [1, 1]} : vector<2x256xf32> to vector<2x128xf32>
    %15 = math.exp %14 : vector<2x128xf32>
    %c0_10 = arith.constant 0 : index
    %c0_11 = arith.constant 0 : index
    %16 = vector.load %arg6[%c0_10, %c0_11] : memref<2x128xf32, #tpu.memory_space<vmem>>, vector<2x128xf32>
    %17 = arith.mulf %15, %16 : vector<2x128xf32>
    %18 = arith.addf %13, %17 : vector<2x128xf32>
    %c0_12 = arith.constant 0 : index
    %c0_13 = arith.constant 0 : index
    %19 = vector.load %arg7[%c0_12, %c0_13] : memref<2x384xf32, #tpu.memory_space<vmem>>, vector<2x128xf32>
    tpu.vector_store %arg7[%c0_12, %c0_13], %18 {strides = array<i32>} : memref<2x384xf32, #tpu.memory_space<vmem>>, vector<2x128xf32>,
    %c0_14 = arith.constant 0 : index
    %c128 = arith.constant 128 : index
    %20 = vector.load %arg7[%c0_14, %c128] : memref<2x384xf32, #tpu.memory_space<vmem>>, vector<2x128xf32>
    tpu.vector_store %arg7[%c0_14, %c128], %13 {strides = array<i32>} : memref<2x384xf32, #tpu.memory_space<vmem>>, vector<2x128xf32>,
    %c0_15 = arith.constant 0 : index
    %c256 = arith.constant 256 : index
    %21 = vector.load %arg7[%c0_15, %c256] : memref<2x384xf32, #tpu.memory_space<vmem>>, vector<2x128xf32>
    tpu.vector_store %arg7[%c0_15, %c256], %15 {strides = array<i32>} : memref<2x384xf32, #tpu.memory_space<vmem>>, vector<2x128xf32>,
    return
  }
  func.func @transform_0(%arg0: i32) -> (i32, i32) {
    %c0_i32 = arith.constant 0 : i32
    %c0_i32_0 = arith.constant 0 : i32
    return %arg0, %c0_i32 : i32, i32
  }
  func.func @transform_1(%arg0: i32) -> (i32, i32) {
    %c0_i32 = arith.constant 0 : i32
    %c0_i32_0 = arith.constant 0 : i32
    %c0_i32_1 = arith.constant 0 : i32
    return %c0_i32, %c0_i32_0 : i32, i32
  }
  func.func @transform_2(%arg0: i32) -> (i32, i32) {
    %c0_i32 = arith.constant 0 : i32
    %c0_i32_0 = arith.constant 0 : i32
    %c0_i32_1 = arith.constant 0 : i32
    return %c0_i32, %c0_i32_0 : i32, i32
  }
  func.func @transform_3(%arg0: i32) -> (i32, i32) {
    %c0_i32 = arith.constant 0 : i32
    %c0_i32_0 = arith.constant 0 : i32
    %c0_i32_1 = arith.constant 0 : i32
    return %c0_i32, %c0_i32_0 : i32, i32
  }
  func.func @transform_4(%arg0: i32) -> (i32, i32) {
    %c0_i32 = arith.constant 0 : i32
    %c0_i32_0 = arith.constant 0 : i32
    %c0_i32_1 = arith.constant 0 : i32
    return %c0_i32, %c0_i32_0 : i32, i32
  }
  func.func @transform_5(%arg0: i32) -> (i32, i32) {
    %c0_i32 = arith.constant 0 : i32
    %c0_i32_0 = arith.constant 0 : i32
    return %arg0, %c0_i32 : i32, i32
  }
  func.func @transform_6(%arg0: i32) -> (i32, i32) {
    %c0_i32 = arith.constant 0 : i32
    %c0_i32_0 = arith.constant 0 : i32
    return %arg0, %c0_i32 : i32, i32
  }
}

</mosaic_0001>

<llo_original>
// kernel: tpu_custom_call.1
$region0: #{tpu_custom_call.1}
  #allocation0 [shape = 'u32[]', space=smem, size = 0x4, offset = 0x4, fixed_abs, tag = 'smem constant byte address 0x4 - core index']
  #allocation1 [shape = 'u32[144,128]{1,0:T(1,128)}', space=vmem, size = 0x12000, scoped, tag = 'internal scratch']
  %s0 = inlined_call_operand.hbm [shape: f32[2,1024], index: 0, kind: input, shape index: {}]
  %s1 = inlined_call_operand.hbm [shape: bf16[1024,128], index: 1, kind: input, shape index: {}]
  %s2 = inlined_call_operand.vmem [shape: f32[1,128], index: 2, kind: input, shape index: {}]
  %s3 = inlined_call_operand.hbm [shape: bf16[128,256], index: 3, kind: input, shape index: {}]
  %s4 = inlined_call_operand.vmem [shape: f32[1,256], index: 4, kind: input, shape index: {}]
  %s5 = inlined_call_operand.vmem [shape: f32[2,128], index: 5, kind: input, shape index: {}]
  %s6 = inlined_call_operand.hbm [shape: f32[2,384], index: 6, kind: output, shape index: {}]
  %s7 = sld [smem:[#allocation0]]
  $region46: #{tpu_custom_call.1} parent=0
    _
  %s9 = ssub.s32 1, %s7
  %s10 = scalar_select 0, %s9, %s7
  $region1: #{tpu_custom_call.1} parent=0
    #allocation2 [shape = 'u8[8192]{0}', space=vmem, size = 0x2000, scoped, tag = 'input window, operand 0, single buffered']
    #allocation3 [shape = 's32[1]{0}', space=sflag, size = 0x4, scoped, tag = 'scoped memory for tpu_custom_call.1']
    #allocation4 [shape = 's32[1]{0}', space=sflag, size = 0x4, scoped, tag = 'scoped memory for tpu_custom_call.1']
    #allocation5 [shape = 'u8[262144]{0}', space=vmem, size = 0x40000, scoped, tag = 'input window, operand 1, single buffered']
    #allocation6 [shape = 's32[1]{0}', space=sflag, size = 0x4, scoped, tag = 'scoped memory for tpu_custom_call.1']
    #allocation7 [shape = 'u8[65536]{0}', space=vmem, size = 0x10000, scoped, tag = 'input window, operand 3, single buffered']
    #allocation8 [shape = 'u8[3072]{0}', space=vmem, size = 0xc00, scoped, tag = 'output window, operand 0, single buffered']
    %11 = vsyncpa [#allocation3], 0
    %12 = vsyncpa [#allocation6], 0
    %13 = vsyncpa [#allocation4], 0
    // Predicated region
    $region2: #{tpu_custom_call.1} parent=1 // pred_check
      _
    $region3: #{tpu_custom_call.1} parent=1 // pred_check_branch
      %15 = sbr.rel (0) target = $region5
    $region4: #{tpu_custom_call.1} parent=1 // pred_region
      %s17 = ssub.s32 256, 256
      %18 = vsyncadd [#allocation3], %s17
      %s20 = sshll.u32 [#allocation2], 4
      %s21 = int_to_ptr.vmem [resolvable:$true] %s20
      %23 = dma.hbm_to_vmem [thread:$0]  %s0, 256, %s21, [#allocation3]
    $region5: #{tpu_custom_call.1} parent=1 // pred_fallthru
      _
    // Predicated region
    $region6: #{tpu_custom_call.1} parent=1 // pred_check
      _
    $region7: #{tpu_custom_call.1} parent=1 // pred_check_branch
      %25 = sbr.rel (0) target = $region9
    $region8: #{tpu_custom_call.1} parent=1 // pred_region
      %s27 = ssub.s32 8192, 8192
      %28 = vsyncadd [#allocation6], %s27
      %s29 = sshll.u32 [#allocation5], 4
      %s30 = int_to_ptr.vmem [resolvable:$true] %s29
      %35 = dma.hbm_to_vmem [thread:$0]  %s1, 8192, %s30, [#allocation6], 64, 64, 4
    $region9: #{tpu_custom_call.1} parent=1 // pred_fallthru
      _
    // Predicated region
    $region10: #{tpu_custom_call.1} parent=1 // pred_check
      _
    $region11: #{tpu_custom_call.1} parent=1 // pred_check_branch
      %37 = sbr.rel (0) target = $region13
    $region12: #{tpu_custom_call.1} parent=1 // pred_region
      _
    $region13: #{tpu_custom_call.1} parent=1 // pred_fallthru
      _
    // Predicated region
    $region14: #{tpu_custom_call.1} parent=1 // pred_check
      _
    $region15: #{tpu_custom_call.1} parent=1 // pred_check_branch
      %39 = sbr.rel (0) target = $region17
    $region16: #{tpu_custom_call.1} parent=1 // pred_region
      %s41 = ssub.s32 2048, 2048
      %42 = vsyncadd [#allocation6], %s41
      %s43 = sshll.u32 [#allocation7], 4
      %s44 = int_to_ptr.vmem [resolvable:$true] %s43
      %49 = dma.hbm_to_vmem [thread:$0]  %s3, 2048, %s44, [#allocation6], 128, 128, 8
    $region17: #{tpu_custom_call.1} parent=1 // pred_fallthru
      _
    // Predicated region
    $region18: #{tpu_custom_call.1} parent=1 // pred_check
      _
    $region19: #{tpu_custom_call.1} parent=1 // pred_check_branch
      %51 = sbr.rel (0) target = $region21
    $region20: #{tpu_custom_call.1} parent=1 // pred_region
      _
    $region21: #{tpu_custom_call.1} parent=1 // pred_fallthru
      _
    // Predicated region
    $region22: #{tpu_custom_call.1} parent=1 // pred_check
      _
    $region23: #{tpu_custom_call.1} parent=1 // pred_check_branch
      %53 = sbr.rel (0) target = $region25
    $region24: #{tpu_custom_call.1} parent=1 // pred_region
      _
    $region25: #{tpu_custom_call.1} parent=1 // pred_fallthru
      _
    // Predicated region
    $region26: #{tpu_custom_call.1} parent=1 // pred_check
      _
    $region27: #{tpu_custom_call.1} parent=1 // pred_check_branch
      %55 = sbr.rel (0) target = $region29
    $region28: #{tpu_custom_call.1} parent=1 // pred_region
      %56 = dma.done [#allocation3], 256
    $region29: #{tpu_custom_call.1} parent=1 // pred_fallthru
      _
    // Predicated region
    $region30: #{tpu_custom_call.1} parent=1 // pred_check
      _
    $region31: #{tpu_custom_call.1} parent=1 // pred_check_branch
      %58 = sbr.rel (0) target = $region33
    $region32: #{tpu_custom_call.1} parent=1 // pred_region
      %59 = dma.done [#allocation6], 8192
    $region33: #{tpu_custom_call.1} parent=1 // pred_fallthru
      _
    // Predicated region
    $region34: #{tpu_custom_call.1} parent=1 // pred_check
      _
    $region35: #{tpu_custom_call.1} parent=1 // pred_check_branch
      %61 = sbr.rel (0) target = $region37
    $region36: #{tpu_custom_call.1} parent=1 // pred_region
      %62 = dma.done [#allocation6], 2048
    $region37: #{tpu_custom_call.1} parent=1 // pred_fallthru
      _
    %v64 = vld [vmem:[#allocation2] sm:$0xff]
    %v65 = vld [vmem:[#allocation2 + $0x8] sm:$0xff]
    %v68 = vcombine.high %v64, %v64
    %v70 = vunpack.c.l.s4 1983009808
    %v71 = vunpack.c.0.s8 %v70
    %v72 = vlaneseq
    %v73 = vshrl.u32 %v72, 7
    %v74 = vsub.s32 %v71, %v73
    %v75 = vrot.slane %v64, %v74
    %v77 = vunpack.c.l.s4 1983009808
    %v78 = vunpack.c.0.s8 %v77
    %v79 = vlaneseq
    %v80 = vshrl.u32 %v79, 7
    %v81 = vsub.s32 %v78, %v80
    %v82 = vrot.slane %v68, %v81
    %v83 = vcombine.high %v75, %v75
    %v84 = vcombine.high %v82, %v82
    %v85 = vcombine.high %v65, %v65
    %v87 = vunpack.c.l.s4 1983009808
    %v88 = vunpack.c.0.s8 %v87
    %v89 = vlaneseq
    %v90 = vshrl.u32 %v89, 7
    %v91 = vsub.s32 %v88, %v90
    %v92 = vrot.slane %v65, %v91
    %v94 = vunpack.c.l.s4 1983009808
    %v95 = vunpack.c.0.s8 %v94
    %v96 = vlaneseq
    %v97 = vshrl.u32 %v96, 7
    %v98 = vsub.s32 %v95, %v97
    %v99 = vrot.slane %v85, %v98
    %v100 = vcombine.high %v92, %v92
    %v101 = vcombine.high %v99, %v99
    %v110 = vpack.c.bf16 %v75, %v75
    %v111 = vpack.c.bf16 %v83, %v83
    %v112 = vpack.c.bf16 %v82, %v82
    %v113 = vpack.c.bf16 %v84, %v84
    %v114 = vpack.c.bf16 %v92, %v92
    %v115 = vpack.c.bf16 %v100, %v100
    %v116 = vpack.c.bf16 %v99, %v99
    %v117 = vpack.c.bf16 %v101, %v101
    %v118 = vld [vmem:[#allocation5] sm:$0xf]
    %v119 = vld [vmem:[#allocation5 + $0x4] sm:$0xf]
    %v120 = vld [vmem:[#allocation5 + $0x8] sm:$0xf]
    %v121 = vld [vmem:[#allocation5 + $0xc] sm:$0xf]
    %v122 = vld [vmem:[#allocation5 + $0x10] sm:$0xf]
    %v123 = vld [vmem:[#allocation5 + $0x14] sm:$0xf]
    %v124 = vld [vmem:[#allocation5 + $0x18] sm:$0xf]
    %v125 = vld [vmem:[#allocation5 + $0x1c] sm:$0xf]
    %v126 = vld [vmem:[#allocation5 + $0x20] sm:$0xf]
    %v127 = vld [vmem:[#allocation5 + $0x24] sm:$0xf]
    %v128 = vld [vmem:[#allocation5 + $0x28] sm:$0xf]
    %v129 = vld [vmem:[#allocation5 + $0x2c] sm:$0xf]
    %v130 = vld [vmem:[#allocation5 + $0x30] sm:$0xf]
    %v131 = vld [vmem:[#allocation5 + $0x34] sm:$0xf]
    %v132 = vld [vmem:[#allocation5 + $0x38] sm:$0xf]
    %v133 = vld [vmem:[#allocation5 + $0x3c] sm:$0xf]
    %v134 = vld [vmem:[#allocation5 + $0x40] sm:$0xf]
    %v135 = vld [vmem:[#allocation5 + $0x44] sm:$0xf]
    %v136 = vld [vmem:[#allocation5 + $0x48] sm:$0xf]
    %v137 = vld [vmem:[#allocation5 + $0x4c] sm:$0xf]
    %v138 = vld [vmem:[#allocation5 + $0x50] sm:$0xf]
    %v139 = vld [vmem:[#allocation5 + $0x54] sm:$0xf]
    %v140 = vld [vmem:[#allocation5 + $0x58] sm:$0xf]
    %v141 = vld [vmem:[#allocation5 + $0x5c] sm:$0xf]
    %v142 = vld [vmem:[#allocation5 + $0x60] sm:$0xf]
    %v143 = vld [vmem:[#allocation5 + $0x64] sm:$0xf]
    %v144 = vld [vmem:[#allocation5 + $0x68] sm:$0xf]
    %v145 = vld [vmem:[#allocation5 + $0x6c] sm:$0xf]
    %v146 = vld [vmem:[#allocation5 + $0x70] sm:$0xf]
    %v147 = vld [vmem:[#allocation5 + $0x74] sm:$0xf]
    %v148 = vld [vmem:[#allocation5 + $0x78] sm:$0xf]
    %v149 = vld [vmem:[#allocation5 + $0x7c] sm:$0xf]
    %v150 = vld [vmem:[#allocation5 + $0x80] sm:$0xf]
    %v151 = vld [vmem:[#allocation5 + $0x84] sm:$0xf]
    %v152 = vld [vmem:[#allocation5 + $0x88] sm:$0xf]
    %v153 = vld [vmem:[#allocation5 + $0x8c] sm:$0xf]
    %v154 = vld [vmem:[#allocation5 + $0x90] sm:$0xf]
    %v155 = vld [vmem:[#allocation5 + $0x94] sm:$0xf]
    %v156 = vld [vmem:[#allocation5 + $0x98] sm:$0xf]
    %v157 = vld [vmem:[#allocation5 + $0x9c] sm:$0xf]
    %v158 = vld [vmem:[#allocation5 + $0xa0] sm:$0xf]
    %v159 = vld [vmem:[#allocation5 + $0xa4] sm:$0xf]
    %v160 = vld [vmem:[#allocation5 + $0xa8] sm:$0xf]
    %v161 = vld [vmem:[#allocation5 + $0xac] sm:$0xf]
    %v162 = vld [vmem:[#allocation5 + $0xb0] sm:$0xf]
    %v163 = vld [vmem:[#allocation5 + $0xb4] sm:$0xf]
    %v164 = vld [vmem:[#allocation5 + $0xb8] sm:$0xf]
    %v165 = vld [vmem:[#allocation5 + $0xbc] sm:$0xf]
    %v166 = vld [vmem:[#allocation5 + $0xc0] sm:$0xf]
    %v167 = vld [vmem:[#allocation5 + $0xc4] sm:$0xf]
    %v168 = vld [vmem:[#allocation5 + $0xc8] sm:$0xf]
    %v169 = vld [vmem:[#allocation5 + $0xcc] sm:$0xf]
    %v170 = vld [vmem:[#allocation5 + $0xd0] sm:$0xf]
    %v171 = vld [vmem:[#allocation5 + $0xd4] sm:$0xf]
    %v172 = vld [vmem:[#allocation5 + $0xd8] sm:$0xf]
    %v173 = vld [vmem:[#allocation5 + $0xdc] sm:$0xf]
    %v174 = vld [vmem:[#allocation5 + $0xe0] sm:$0xf]
    %v175 = vld [vmem:[#allocation5 + $0xe4] sm:$0xf]
    %v176 = vld [vmem:[#allocation5 + $0xe8] sm:$0xf]
    %v177 = vld [vmem:[#allocation5 + $0xec] sm:$0xf]
    %v178 = vld [vmem:[#allocation5 + $0xf0] sm:$0xf]
    %v179 = vld [vmem:[#allocation5 + $0xf4] sm:$0xf]
    %v180 = vld [vmem:[#allocation5 + $0xf8] sm:$0xf]
    %v181 = vld [vmem:[#allocation5 + $0xfc] sm:$0xf]
    %v182 = vld [vmem:[#allocation5 + $0x100] sm:$0xf]
    %v183 = vld [vmem:[#allocation5 + $0x104] sm:$0xf]
    %v184 = vld [vmem:[#allocation5 + $0x108] sm:$0xf]
    %v185 = vld [vmem:[#allocation5 + $0x10c] sm:$0xf]
    %v186 = vld [vmem:[#allocation5 + $0x110] sm:$0xf]
    %v187 = vld [vmem:[#allocation5 + $0x114] sm:$0xf]
    %v188 = vld [vmem:[#allocation5 + $0x118] sm:$0xf]
    %v189 = vld [vmem:[#allocation5 + $0x11c] sm:$0xf]
    %v190 = vld [vmem:[#allocation5 + $0x120] sm:$0xf]
    %v191 = vld [vmem:[#allocation5 + $0x124] sm:$0xf]
    %v192 = vld [vmem:[#allocation5 + $0x128] sm:$0xf]
    %v193 = vld [vmem:[#allocation5 + $0x12c] sm:$0xf]
    %v194 = vld [vmem:[#allocation5 + $0x130] sm:$0xf]
    %v195 = vld [vmem:[#allocation5 + $0x134] sm:$0xf]
    %v196 = vld [vmem:[#allocation5 + $0x138] sm:$0xf]
    %v197 = vld [vmem:[#allocation5 + $0x13c] sm:$0xf]
    %v198 = vld [vmem:[#allocation5 + $0x140] sm:$0xf]
    %v199 = vld [vmem:[#allocation5 + $0x144] sm:$0xf]
    %v200 = vld [vmem:[#allocation5 + $0x148] sm:$0xf]
    %v201 = vld [vmem:[#allocation5 + $0x14c] sm:$0xf]
    %v202 = vld [vmem:[#allocation5 + $0x150] sm:$0xf]
    %v203 = vld [vmem:[#allocation5 + $0x154] sm:$0xf]
    %v204 = vld [vmem:[#allocation5 + $0x158] sm:$0xf]
    %v205 = vld [vmem:[#allocation5 + $0x15c] sm:$0xf]
    %v206 = vld [vmem:[#allocation5 + $0x160] sm:$0xf]
    %v207 = vld [vmem:[#allocation5 + $0x164] sm:$0xf]
    %v208 = vld [vmem:[#allocation5 + $0x168] sm:$0xf]
    %v209 = vld [vmem:[#allocation5 + $0x16c] sm:$0xf]
    %v210 = vld [vmem:[#allocation5 + $0x170] sm:$0xf]
    %v211 = vld [vmem:[#allocation5 + $0x174] sm:$0xf]
    %v212 = vld [vmem:[#allocation5 + $0x178] sm:$0xf]
    %v213 = vld [vmem:[#allocation5 + $0x17c] sm:$0xf]
    %v214 = vld [vmem:[#allocation5 + $0x180] sm:$0xf]
    %v215 = vld [vmem:[#allocation5 + $0x184] sm:$0xf]
    %v216 = vld [vmem:[#allocation5 + $0x188] sm:$0xf]
    %v217 = vld [vmem:[#allocation5 + $0x18c] sm:$0xf]
    %v218 = vld [vmem:[#allocation5 + $0x190] sm:$0xf]
    %v219 = vld [vmem:[#allocation5 + $0x194] sm:$0xf]
    %v220 = vld [vmem:[#allocation5 + $0x198] sm:$0xf]
    %v221 = vld [vmem:[#allocation5 + $0x19c] sm:$0xf]
    %v222 = vld [vmem:[#allocation5 + $0x1a0] sm:$0xf]
    %v223 = vld [vmem:[#allocation5 + $0x1a4] sm:$0xf]
    %v224 = vld [vmem:[#allocation5 + $0x1a8] sm:$0xf]
    %v225 = vld [vmem:[#allocation5 + $0x1ac] sm:$0xf]
    %v226 = vld [vmem:[#allocation5 + $0x1b0] sm:$0xf]
    %v227 = vld [vmem:[#allocation5 + $0x1b4] sm:$0xf]
    %v228 = vld [vmem:[#allocation5 + $0x1b8] sm:$0xf]
    %v229 = vld [vmem:[#allocation5 + $0x1bc] sm:$0xf]
    %v230 = vld [vmem:[#allocation5 + $0x1c0] sm:$0xf]
    %v231 = vld [vmem:[#allocation5 + $0x1c4] sm:$0xf]
    %v232 = vld [vmem:[#allocation5 + $0x1c8] sm:$0xf]
    %v233 = vld [vmem:[#allocation5 + $0x1cc] sm:$0xf]
    %v234 = vld [vmem:[#allocation5 + $0x1d0] sm:$0xf]
    %v235 = vld [vmem:[#allocation5 + $0x1d4] sm:$0xf]
    %v236 = vld [vmem:[#allocation5 + $0x1d8] sm:$0xf]
    %v237 = vld [vmem:[#allocation5 + $0x1dc] sm:$0xf]
    %v238 = vld [vmem:[#allocation5 + $0x1e0] sm:$0xf]
    %v239 = vld [vmem:[#allocation5 + $0x1e4] sm:$0xf]
    %v240 = vld [vmem:[#allocation5 + $0x1e8] sm:$0xf]
    %v241 = vld [vmem:[#allocation5 + $0x1ec] sm:$0xf]
    %v242 = vld [vmem:[#allocation5 + $0x1f0] sm:$0xf]
    %v243 = vld [vmem:[#allocation5 + $0x1f4] sm:$0xf]
    %v244 = vld [vmem:[#allocation5 + $0x1f8] sm:$0xf]
    %v245 = vld [vmem:[#allocation5 + $0x1fc] sm:$0xf]
    %v246 = vld [vmem:[%s2] sm:$0x1]
    %v248 = vlaneseq
    %v249 = vshrl.u32 %v248, 7
    %v250 = vsub.s32 0, %v249
    %v251 = vrot.slane %v246, %v250
    %v381 = vunpack.c.l.b16 %v118
    %v382 = vunpack.c.l.b16 %v119
    %v383 = vunpack.c.l.b16 %v120
    %v384 = vunpack.c.l.b16 %v121
    %v385 = vunpack.c.l.b16 %v122
    %v386 = vunpack.c.l.b16 %v123
    %v387 = vunpack.c.l.b16 %v124
    %v388 = vunpack.c.l.b16 %v125
    %v389 = vunpack.c.l.b16 %v126
    %v390 = vunpack.c.l.b16 %v127
    %v391 = vunpack.c.l.b16 %v128
    %v392 = vunpack.c.l.b16 %v129
    %v393 = vunpack.c.l.b16 %v130
    %v394 = vunpack.c.l.b16 %v131
    %v395 = vunpack.c.l.b16 %v132
    %v396 = vunpack.c.l.b16 %v133
    %v397 = vunpack.c.l.b16 %v134
    %v398 = vunpack.c.l.b16 %v135
    %v399 = vunpack.c.l.b16 %v136
    %v400 = vunpack.c.l.b16 %v137
    %v401 = vunpack.c.l.b16 %v138
    %v402 = vunpack.c.l.b16 %v139
    %v403 = vunpack.c.l.b16 %v140
    %v404 = vunpack.c.l.b16 %v141
    %v405 = vunpack.c.l.b16 %v142
    %v406 = vunpack.c.l.b16 %v143
    %v407 = vunpack.c.l.b16 %v144
    %v408 = vunpack.c.l.b16 %v145
    %v409 = vunpack.c.l.b16 %v146
    %v410 = vunpack.c.l.b16 %v147
    %v411 = vunpack.c.l.b16 %v148
    %v412 = vunpack.c.l.b16 %v149
    %v413 = vunpack.c.l.b16 %v150
    %v414 = vunpack.c.l.b16 %v151
    %v415 = vunpack.c.l.b16 %v152
    %v416 = vunpack.c.l.b16 %v153
    %v417 = vunpack.c.l.b16 %v154
    %v418 = vunpack.c.l.b16 %v155
    %v419 = vunpack.c.l.b16 %v156
    %v420 = vunpack.c.l.b16 %v157
    %v421 = vunpack.c.l.b16 %v158
    %v422 = vunpack.c.l.b16 %v159
    %v423 = vunpack.c.l.b16 %v160
    %v424 = vunpack.c.l.b16 %v161
    %v425 = vunpack.c.l.b16 %v162
    %v426 = vunpack.c.l.b16 %v163
    %v427 = vunpack.c.l.b16 %v164
    %v428 = vunpack.c.l.b16 %v165
    %v429 = vunpack.c.l.b16 %v166
    %v430 = vunpack.c.l.b16 %v167
    %v431 = vunpack.c.l.b16 %v168
    %v432 = vunpack.c.l.b16 %v169
    %v433 = vunpack.c.l.b16 %v170
    %v434 = vunpack.c.l.b16 %v171
    %v435 = vunpack.c.l.b16 %v172
    %v436 = vunpack.c.l.b16 %v173
    %v437 = vunpack.c.l.b16 %v174
    %v438 = vunpack.c.l.b16 %v175
    %v439 = vunpack.c.l.b16 %v176
    %v440 = vunpack.c.l.b16 %v177
    %v441 = vunpack.c.l.b16 %v178
    %v442 = vunpack.c.l.b16 %v179
    %v443 = vunpack.c.l.b16 %v180
    %v444 = vunpack.c.l.b16 %v181
    %v445 = vunpack.c.l.b16 %v182
    %v446 = vunpack.c.l.b16 %v183
    %v447 = vunpack.c.l.b16 %v184
    %v448 = vunpack.c.l.b16 %v185
    %v449 = vunpack.c.l.b16 %v186
    %v450 = vunpack.c.l.b16 %v187
    %v451 = vunpack.c.l.b16 %v188
    %v452 = vunpack.c.l.b16 %v189
    %v453 = vunpack.c.l.b16 %v190
    %v454 = vunpack.c.l.b16 %v191
    %v455 = vunpack.c.l.b16 %v192
    %v456 = vunpack.c.l.b16 %v193
    %v457 = vunpack.c.l.b16 %v194
    %v458 = vunpack.c.l.b16 %v195
    %v459 = vunpack.c.l.b16 %v196
    %v460 = vunpack.c.l.b16 %v197
    %v461 = vunpack.c.l.b16 %v198
    %v462 = vunpack.c.l.b16 %v199
    %v463 = vunpack.c.l.b16 %v200
    %v464 = vunpack.c.l.b16 %v201
    %v465 = vunpack.c.l.b16 %v202
    %v466 = vunpack.c.l.b16 %v203
    %v467 = vunpack.c.l.b16 %v204
    %v468 = vunpack.c.l.b16 %v205
    %v469 = vunpack.c.l.b16 %v206
    %v470 = vunpack.c.l.b16 %v207
    %v471 = vunpack.c.l.b16 %v208
    %v472 = vunpack.c.l.b16 %v209
    %v473 = vunpack.c.l.b16 %v210
    %v474 = vunpack.c.l.b16 %v211
    %v475 = vunpack.c.l.b16 %v212
    %v476 = vunpack.c.l.b16 %v213
    %v477 = vunpack.c.l.b16 %v214
    %v478 = vunpack.c.l.b16 %v215
    %v479 = vunpack.c.l.b16 %v216
    %v480 = vunpack.c.l.b16 %v217
    %v481 = vunpack.c.l.b16 %v218
    %v482 = vunpack.c.l.b16 %v219
    %v483 = vunpack.c.l.b16 %v220
    %v484 = vunpack.c.l.b16 %v221
    %v485 = vunpack.c.l.b16 %v222
    %v486 = vunpack.c.l.b16 %v223
    %v487 = vunpack.c.l.b16 %v224
    %v488 = vunpack.c.l.b16 %v225
    %v489 = vunpack.c.l.b16 %v226
    %v490 = vunpack.c.l.b16 %v227
    %v491 = vunpack.c.l.b16 %v228
    %v492 = vunpack.c.l.b16 %v229
    %v493 = vunpack.c.l.b16 %v230
    %v494 = vunpack.c.l.b16 %v231
    %v495 = vunpack.c.l.b16 %v232
    %v496 = vunpack.c.l.b16 %v233
    %v497 = vunpack.c.l.b16 %v234
    %v498 = vunpack.c.l.b16 %v235
    %v499 = vunpack.c.l.b16 %v236
    %v500 = vunpack.c.l.b16 %v237
    %v501 = vunpack.c.l.b16 %v238
    %v502 = vunpack.c.l.b16 %v239
    %v503 = vunpack.c.l.b16 %v240
    %v504 = vunpack.c.l.b16 %v241
    %v505 = vunpack.c.l.b16 %v242
    %v506 = vunpack.c.l.b16 %v243
    %v507 = vunpack.c.l.b16 %v244
    %v508 = vunpack.c.l.b16 %v245
    %v509 = vpack.c.b16 %v382, %v381
    %v510 = vpack.c.b16 %v384, %v383
    %v511 = vpack.c.b16 %v386, %v385
    %v512 = vpack.c.b16 %v388, %v387
    %v513 = vpack.c.b16 %v390, %v389
    %v514 = vpack.c.b16 %v392, %v391
    %v515 = vpack.c.b16 %v394, %v393
    %v516 = vpack.c.b16 %v396, %v395
    %v517 = vpack.c.b16 %v398, %v397
    %v518 = vpack.c.b16 %v400, %v399
    %v519 = vpack.c.b16 %v402, %v401
    %v520 = vpack.c.b16 %v404, %v403
    %v521 = vpack.c.b16 %v406, %v405
    %v522 = vpack.c.b16 %v408, %v407
    %v523 = vpack.c.b16 %v410, %v409
    %v524 = vpack.c.b16 %v412, %v411
    %v525 = vpack.c.b16 %v414, %v413
    %v526 = vpack.c.b16 %v416, %v415
    %v527 = vpack.c.b16 %v418, %v417
    %v528 = vpack.c.b16 %v420, %v419
    %v529 = vpack.c.b16 %v422, %v421
    %v530 = vpack.c.b16 %v424, %v423
    %v531 = vpack.c.b16 %v426, %v425
    %v532 = vpack.c.b16 %v428, %v427
    %v533 = vpack.c.b16 %v430, %v429
    %v534 = vpack.c.b16 %v432, %v431
    %v535 = vpack.c.b16 %v434, %v433
    %v536 = vpack.c.b16 %v436, %v435
    %v537 = vpack.c.b16 %v438, %v437
    %v538 = vpack.c.b16 %v440, %v439
    %v539 = vpack.c.b16 %v442, %v441
    %v540 = vpack.c.b16 %v444, %v443
    %v541 = vpack.c.b16 %v446, %v445
    %v542 = vpack.c.b16 %v448, %v447
    %v543 = vpack.c.b16 %v450, %v449
    %v544 = vpack.c.b16 %v452, %v451
    %v545 = vpack.c.b16 %v454, %v453
    %v546 = vpack.c.b16 %v456, %v455
    %v547 = vpack.c.b16 %v458, %v457
    %v548 = vpack.c.b16 %v460, %v459
    %v549 = vpack.c.b16 %v462, %v461
    %v550 = vpack.c.b16 %v464, %v463
    %v551 = vpack.c.b16 %v466, %v465
    %v552 = vpack.c.b16 %v468, %v467
    %v553 = vpack.c.b16 %v470, %v469
    %v554 = vpack.c.b16 %v472, %v471
    %v555 = vpack.c.b16 %v474, %v473
    %v556 = vpack.c.b16 %v476, %v475
    %v557 = vpack.c.b16 %v478, %v477
    %v558 = vpack.c.b16 %v480, %v479
    %v559 = vpack.c.b16 %v482, %v481
    %v560 = vpack.c.b16 %v484, %v483
    %v561 = vpack.c.b16 %v486, %v485
    %v562 = vpack.c.b16 %v488, %v487
    %v563 = vpack.c.b16 %v490, %v489
    %v564 = vpack.c.b16 %v492, %v491
    %v565 = vpack.c.b16 %v494, %v493
    %v566 = vpack.c.b16 %v496, %v495
    %v567 = vpack.c.b16 %v498, %v497
    %v568 = vpack.c.b16 %v500, %v499
    %v569 = vpack.c.b16 %v502, %v501
    %v570 = vpack.c.b16 %v504, %v503
    %v571 = vpack.c.b16 %v506, %v505
    %v572 = vpack.c.b16 %v508, %v507
    %637 = vmatprep.subr.bf16.mxu0 0
    %638 = vmatpush1.bf16.msra.mxu0 %v516
    %639 = vmatprep.subr.bf16.mxu0 0
    %640 = vmatpush1.bf16.msra.mxu0 %v515
    %641 = vmatprep.subr.bf16.mxu0 0
    %642 = vmatpush1.bf16.msra.mxu0 %v514
    %643 = vmatprep.subr.bf16.mxu0 0
    %644 = vmatpush1.bf16.msra.mxu0 %v513
    %645 = vmatprep.subr.bf16.mxu0 0
    %646 = vmatpush1.bf16.msra.mxu0 %v512
    %647 = vmatprep.subr.bf16.mxu0 0
    %648 = vmatpush1.bf16.msra.mxu0 %v511
    %649 = vmatprep.subr.bf16.mxu0 0
    %650 = vmatpush1.bf16.msra.mxu0 %v510
    %651 = vmatprep.subr.bf16.mxu0 0
    %652 = vmatpush1.bf16.msra.mxu0 %v509
    %653 = vmatprep.subr.bf16.mxu0 0
    %654 = vmatpush2.bf16.msra.mxu0 %v524
    %655 = vmatprep.subr.bf16.mxu0 0
    %656 = vmatpush2.bf16.msra.mxu0 %v523
    %657 = vmatprep.subr.bf16.mxu0 0
    %658 = vmatpush2.bf16.msra.mxu0 %v522
    %659 = vmatprep.subr.bf16.mxu0 0
    %660 = vmatpush2.bf16.msra.mxu0 %v521
    %661 = vmatprep.subr.bf16.mxu0 0
    %662 = vmatpush2.bf16.msra.mxu0 %v520
    %663 = vmatprep.subr.bf16.mxu0 0
    %664 = vmatpush2.bf16.msra.mxu0 %v519
    %665 = vmatprep.subr.bf16.mxu0 0
    %666 = vmatpush2.bf16.msra.mxu0 %v518
    %667 = vmatprep.subr.bf16.mxu0 0
    %668 = vmatpush2.bf16.msra.mxu0 %v517
    %669 = vmatprep.mubr.bf16.mxu0 %v111
    %670 = vmatmul.mubr.bf16.gmra.mxu0 %v110
    %v671 = vpop.f32.mrf.mxu0
    %v672 = vadd.f32 %v251, %v671
    %v673 = vpop.f32.mrf.mxu0
    %v674 = vpop.f32.mrf.mxu0
    %v675 = vpop.f32.mrf.mxu0
    %676 = vdwg.mxu0
    %677 = vmatprep.subr.bf16.mxu0 0
    %678 = vmatpush1.bf16.msra.mxu0 %v532
    %679 = vmatprep.subr.bf16.mxu0 0
    %680 = vmatpush1.bf16.msra.mxu0 %v531
    %681 = vmatprep.subr.bf16.mxu0 0
    %682 = vmatpush1.bf16.msra.mxu0 %v530
    %683 = vmatprep.subr.bf16.mxu0 0
    %684 = vmatpush1.bf16.msra.mxu0 %v529
    %685 = vmatprep.subr.bf16.mxu0 0
    %686 = vmatpush1.bf16.msra.mxu0 %v528
    %687 = vmatprep.subr.bf16.mxu0 0
    %688 = vmatpush1.bf16.msra.mxu0 %v527
    %689 = vmatprep.subr.bf16.mxu0 0
    %690 = vmatpush1.bf16.msra.mxu0 %v526
    %691 = vmatprep.subr.bf16.mxu0 0
    %692 = vmatpush1.bf16.msra.mxu0 %v525
    %693 = vmatprep.subr.bf16.mxu0 0
    %694 = vmatpush2.bf16.msra.mxu0 %v540
    %695 = vmatprep.subr.bf16.mxu0 0
    %696 = vmatpush2.bf16.msra.mxu0 %v539
    %697 = vmatprep.subr.bf16.mxu0 0
    %698 = vmatpush2.bf16.msra.mxu0 %v538
    %699 = vmatprep.subr.bf16.mxu0 0
    %700 = vmatpush2.bf16.msra.mxu0 %v537
    %701 = vmatprep.subr.bf16.mxu0 0
    %702 = vmatpush2.bf16.msra.mxu0 %v536
    %703 = vmatprep.subr.bf16.mxu0 0
    %704 = vmatpush2.bf16.msra.mxu0 %v535
    %705 = vmatprep.subr.bf16.mxu0 0
    %706 = vmatpush2.bf16.msra.mxu0 %v534
    %707 = vmatprep.subr.bf16.mxu0 0
    %708 = vmatpush2.bf16.msra.mxu0 %v533
    %709 = vmatprep.mubr.bf16.mxu0 %v113
    %710 = vmatmul.mubr.bf16.gmra.mxu0 %v112
    %v711 = vpop.f32.mrf.mxu0
    %v712 = vadd.f32 %v672, %v711
    %v713 = vpop.f32.mrf.mxu0
    %v714 = vpop.f32.mrf.mxu0
    %v715 = vpop.f32.mrf.mxu0
    %716 = vdwg.mxu0
    %717 = vmatprep.subr.bf16.mxu0 0
    %718 = vmatpush1.bf16.msra.mxu0 %v548
    %719 = vmatprep.subr.bf16.mxu0 0
    %720 = vmatpush1.bf16.msra.mxu0 %v547
    %721 = vmatprep.subr.bf16.mxu0 0
    %722 = vmatpush1.bf16.msra.mxu0 %v546
    %723 = vmatprep.subr.bf16.mxu0 0
    %724 = vmatpush1.bf16.msra.mxu0 %v545
    %725 = vmatprep.subr.bf16.mxu0 0
    %726 = vmatpush1.bf16.msra.mxu0 %v544
    %727 = vmatprep.subr.bf16.mxu0 0
    %728 = vmatpush1.bf16.msra.mxu0 %v543
    %729 = vmatprep.subr.bf16.mxu0 0
    %730 = vmatpush1.bf16.msra.mxu0 %v542
    %731 = vmatprep.subr.bf16.mxu0 0
    %732 = vmatpush1.bf16.msra.mxu0 %v541
    %733 = vmatprep.subr.bf16.mxu0 0
    %734 = vmatpush2.bf16.msra.mxu0 %v556
    %735 = vmatprep.subr.bf16.mxu0 0
    %736 = vmatpush2.bf16.msra.mxu0 %v555
    %737 = vmatprep.subr.bf16.mxu0 0
    %738 = vmatpush2.bf16.msra.mxu0 %v554
    %739 = vmatprep.subr.bf16.mxu0 0
    %740 = vmatpush2.bf16.msra.mxu0 %v553
    %741 = vmatprep.subr.bf16.mxu0 0
    %742 = vmatpush2.bf16.msra.mxu0 %v552
    %743 = vmatprep.subr.bf16.mxu0 0
    %744 = vmatpush2.bf16.msra.mxu0 %v551
    %745 = vmatprep.subr.bf16.mxu0 0
    %746 = vmatpush2.bf16.msra.mxu0 %v550
    %747 = vmatprep.subr.bf16.mxu0 0
    %748 = vmatpush2.bf16.msra.mxu0 %v549
    %749 = vmatprep.mubr.bf16.mxu0 %v115
    %750 = vmatmul.mubr.bf16.gmra.mxu0 %v114
    %v751 = vpop.f32.mrf.mxu0
    %v752 = vadd.f32 %v712, %v751
    %v753 = vpop.f32.mrf.mxu0
    %v754 = vpop.f32.mrf.mxu0
    %v755 = vpop.f32.mrf.mxu0
    %756 = vdwg.mxu0
    %757 = vmatprep.subr.bf16.mxu0 0
    %758 = vmatpush1.bf16.msra.mxu0 %v564
    %759 = vmatprep.subr.bf16.mxu0 0
    %760 = vmatpush1.bf16.msra.mxu0 %v563
    %761 = vmatprep.subr.bf16.mxu0 0
    %762 = vmatpush1.bf16.msra.mxu0 %v562
    %763 = vmatprep.subr.bf16.mxu0 0
    %764 = vmatpush1.bf16.msra.mxu0 %v561
    %765 = vmatprep.subr.bf16.mxu0 0
    %766 = vmatpush1.bf16.msra.mxu0 %v560
    %767 = vmatprep.subr.bf16.mxu0 0
    %768 = vmatpush1.bf16.msra.mxu0 %v559
    %769 = vmatprep.subr.bf16.mxu0 0
    %770 = vmatpush1.bf16.msra.mxu0 %v558
    %771 = vmatprep.subr.bf16.mxu0 0
    %772 = vmatpush1.bf16.msra.mxu0 %v557
    %773 = vmatprep.subr.bf16.mxu0 0
    %774 = vmatpush2.bf16.msra.mxu0 %v572
    %775 = vmatprep.subr.bf16.mxu0 0
    %776 = vmatpush2.bf16.msra.mxu0 %v571
    %777 = vmatprep.subr.bf16.mxu0 0
    %778 = vmatpush2.bf16.msra.mxu0 %v570
    %779 = vmatprep.subr.bf16.mxu0 0
    %780 = vmatpush2.bf16.msra.mxu0 %v569
    %781 = vmatprep.subr.bf16.mxu0 0
    %782 = vmatpush2.bf16.msra.mxu0 %v568
    %783 = vmatprep.subr.bf16.mxu0 0
    %784 = vmatpush2.bf16.msra.mxu0 %v567
    %785 = vmatprep.subr.bf16.mxu0 0
    %786 = vmatpush2.bf16.msra.mxu0 %v566
    %787 = vmatprep.subr.bf16.mxu0 0
    %788 = vmatpush2.bf16.msra.mxu0 %v565
    %789 = vmatprep.mubr.bf16.mxu0 %v117
    %790 = vmatmul.mubr.bf16.gmra.mxu0 %v116
    %v791 = vpop.f32.mrf.mxu0
    %v792 = vadd.f32 %v752, %v791
    %v793 = vpop.f32.mrf.mxu0
    %v794 = vpop.f32.mrf.mxu0
    %v795 = vpop.f32.mrf.mxu0
    %796 = vdwg.mxu0
    %v797 = vpack.c.bf16 %v792, %v792
    %v798 = vld [vmem:[#allocation7] sm:$0xff]
    %v799 = vld [vmem:[#allocation7 + $0x8] sm:$0xff]
    %v800 = vld [vmem:[#allocation7 + $0x10] sm:$0xff]
    %v801 = vld [vmem:[#allocation7 + $0x18] sm:$0xff]
    %v802 = vld [vmem:[#allocation7 + $0x20] sm:$0xff]
    %v803 = vld [vmem:[#allocation7 + $0x28] sm:$0xff]
    %v804 = vld [vmem:[#allocation7 + $0x30] sm:$0xff]
    %v805 = vld [vmem:[#allocation7 + $0x38] sm:$0xff]
    %v806 = vld [vmem:[#allocation7 + $0x40] sm:$0xff]
    %v807 = vld [vmem:[#allocation7 + $0x48] sm:$0xff]
    %v808 = vld [vmem:[#allocation7 + $0x50] sm:$0xff]
    %v809 = vld [vmem:[#allocation7 + $0x58] sm:$0xff]
    %v810 = vld [vmem:[#allocation7 + $0x60] sm:$0xff]
    %v811 = vld [vmem:[#allocation7 + $0x68] sm:$0xff]
    %v812 = vld [vmem:[#allocation7 + $0x70] sm:$0xff]
    %v813 = vld [vmem:[#allocation7 + $0x78] sm:$0xff]
    %v814 = vld [vmem:[%s4] sm:$0x3]
    %v816 = vlaneseq
    %v817 = vshrl.u32 %v816, 7
    %v818 = vsub.s32 0, %v817
    %v819 = vrot.slane %v814, %v818
    %v820 = vlaneseq
    %v821 = vshrl.u32 %v820, 7
    %v822 = vsub.s32 1, %v821
    %v823 = vrot.slane %v814, %v822
    %v842 = vunpack.c.l.b16 %v798
    %v843 = vunpack.c.h.b16 %v798
    %v844 = vunpack.c.l.b16 %v799
    %v845 = vunpack.c.h.b16 %v799
    %v846 = vunpack.c.l.b16 %v800
    %v847 = vunpack.c.h.b16 %v800
    %v848 = vunpack.c.l.b16 %v801
    %v849 = vunpack.c.h.b16 %v801
    %v850 = vunpack.c.l.b16 %v802
    %v851 = vunpack.c.h.b16 %v802
    %v852 = vunpack.c.l.b16 %v803
    %v853 = vunpack.c.h.b16 %v803
    %v854 = vunpack.c.l.b16 %v804
    %v855 = vunpack.c.h.b16 %v804
    %v856 = vunpack.c.l.b16 %v805
    %v857 = vunpack.c.h.b16 %v805
    %v858 = vunpack.c.l.b16 %v806
    %v859 = vunpack.c.h.b16 %v806
    %v860 = vunpack.c.l.b16 %v807
    %v861 = vunpack.c.h.b16 %v807
    %v862 = vunpack.c.l.b16 %v808
    %v863 = vunpack.c.h.b16 %v808
    %v864 = vunpack.c.l.b16 %v809
    %v865 = vunpack.c.h.b16 %v809
    %v866 = vunpack.c.l.b16 %v810
    %v867 = vunpack.c.h.b16 %v810
    %v868 = vunpack.c.l.b16 %v811
    %v869 = vunpack.c.h.b16 %v811
    %v870 = vunpack.c.l.b16 %v812
    %v871 = vunpack.c.h.b16 %v812
    %v872 = vunpack.c.l.b16 %v813
    %v873 = vunpack.c.h.b16 %v813
    %v874 = vpack.c.b16 %v844, %v842
    %v875 = vpack.c.b16 %v845, %v843
    %v876 = vpack.c.b16 %v848, %v846
    %v877 = vpack.c.b16 %v849, %v847
    %v878 = vpack.c.b16 %v852, %v850
    %v879 = vpack.c.b16 %v853, %v851
    %v880 = vpack.c.b16 %v856, %v854
    %v881 = vpack.c.b16 %v857, %v855
    %v882 = vpack.c.b16 %v860, %v858
    %v883 = vpack.c.b16 %v861, %v859
    %v884 = vpack.c.b16 %v864, %v862
    %v885 = vpack.c.b16 %v865, %v863
    %v886 = vpack.c.b16 %v868, %v866
    %v887 = vpack.c.b16 %v869, %v867
    %v888 = vpack.c.b16 %v872, %v870
    %v889 = vpack.c.b16 %v873, %v871
    %906 = vmatprep.subr.bf16.mxu0 %v889
    %907 = vmatpush1.bf16.msra.mxu0 %v888
    %908 = vmatprep.subr.bf16.mxu0 %v887
    %909 = vmatpush1.bf16.msra.mxu0 %v886
    %910 = vmatprep.subr.bf16.mxu0 %v885
    %911 = vmatpush1.bf16.msra.mxu0 %v884
    %912 = vmatprep.subr.bf16.mxu0 %v883
    %913 = vmatpush1.bf16.msra.mxu0 %v882
    %914 = vmatprep.subr.bf16.mxu0 %v881
    %915 = vmatpush1.bf16.msra.mxu0 %v880
    %916 = vmatprep.subr.bf16.mxu0 %v879
    %917 = vmatpush1.bf16.msra.mxu0 %v878
    %918 = vmatprep.subr.bf16.mxu0 %v877
    %919 = vmatpush1.bf16.msra.mxu0 %v876
    %920 = vmatprep.subr.bf16.mxu0 %v875
    %921 = vmatpush1.bf16.msra.mxu0 %v874
    %922 = vmatprep.subr.bf16.mxu0 0
    %923 = vmatpush2.bf16.msra.mxu0 0
    %924 = vmatprep.subr.bf16.mxu0 0
    %925 = vmatpush2.bf16.msra.mxu0 0
    %926 = vmatprep.subr.bf16.mxu0 0
    %927 = vmatpush2.bf16.msra.mxu0 0
    %928 = vmatprep.subr.bf16.mxu0 0
    %929 = vmatpush2.bf16.msra.mxu0 0
    %930 = vmatprep.subr.bf16.mxu0 0
    %931 = vmatpush2.bf16.msra.mxu0 0
    %932 = vmatprep.subr.bf16.mxu0 0
    %933 = vmatpush2.bf16.msra.mxu0 0
    %934 = vmatprep.subr.bf16.mxu0 0
    %935 = vmatpush2.bf16.msra.mxu0 0
    %936 = vmatprep.subr.bf16.mxu0 0
    %937 = vmatpush2.bf16.msra.mxu0 0
    %938 = vmatprep.mubr.bf16.mxu0 0
    %939 = vmatmul.mubr.bf16.gmra.mxu0 %v797
    %v940 = vpop.f32.mrf.mxu0
    %v941 = vadd.f32 %v819, %v940
    %v942 = vpop.f32.mrf.mxu0
    %v943 = vadd.f32 %v823, %v942
    %v944 = vpop.f32.mrf.mxu0
    %v945 = vpop.f32.mrf.mxu0
    %946 = vdwg.mxu0
    %v947 = vmul.f32 %v943, 1.442695
    %v948 = vpow.pop %v947
    %v949 = vld [vmem:[%s5] sm:$0x3]
    %v950 = vmul.f32 %v948, %v949
    %v951 = vadd.f32 %v941, %v950
    %952 = vst [vmem:[#allocation8] sm:$0x3] %v951
    %953 = vst [vmem:[#allocation8 + $0x2] sm:$0x3] %v941
    %954 = vst [vmem:[#allocation8 + $0x4] sm:$0x3] %v948
    // Predicated region
    $region38: #{tpu_custom_call.1} parent=1 // pred_check
      _
    $region39: #{tpu_custom_call.1} parent=1 // pred_check_branch
      %956 = sbr.rel (0) target = $region41
    $region40: #{tpu_custom_call.1} parent=1 // pred_region
      %s958 = ssub.s32 96, 96
      %959 = vsyncadd [#allocation4], %s958
      %s961 = sshll.u32 [#allocation8], 4
      %s962 = int_to_ptr.vmem [resolvable:$true] %s961
      %964 = dma.vmem_to_hbm [thread:$0]  %s962, 96, %s6, [#allocation4]
    $region41: #{tpu_custom_call.1} parent=1 // pred_fallthru
      _
    // Predicated region
    $region42: #{tpu_custom_call.1} parent=1 // pred_check
      _
    $region43: #{tpu_custom_call.1} parent=1 // pred_check_branch
      %966 = sbr.rel (0) target = $region45
    $region44: #{tpu_custom_call.1} parent=1 // pred_region
      %967 = dma.done [#allocation4], 96
    $region45: #{tpu_custom_call.1} parent=1 // pred_fallthru
      _
    %968 = vsyncpa [#allocation3], 1
    %969 = vsyncpa [#allocation6], 1
    %970 = vsyncpa [#allocation4], 1

</llo_original>
